<compile_context>
chip_gen: v7x
topology: tpu7x:2x2x1
jax: 0.10.0
libtpu: 0.0.40
codegen_flags: <defaults>
</compile_context>

<pallas_src>
import functools

import jax
import jax.numpy as jnp
from jax.experimental import pallas as pl
from jax.experimental.pallas import tpu as pltpu


def _linker_kernel(x_ref, o_ref, *, k, s, tho, wo, c, pad_lo):
    """AvgPool2d(k, s) + channel zero-pad, NHWC with (W, C) fused into lanes.

    x_ref: (bt, h_blk, w*c)      lanes = w*c        (lane-dense loads)
    o_ref: (bt, tho, wo*c_out)   lanes = wo*c_out   (one lane-dense store)
    """
    bt = x_ref.shape[0]
    w_c = x_ref.shape[-1]                      # w * c
    c_out = c + 2 * pad_lo
    wd = wo * c_out
    inv = 1.0 / float(k * k)
    out_dtype = o_ref.dtype

    # ---- H-direction pooling: k lane-dense strided row-slab loads + adds ----
    def hslab(ki):
        if s == 1:
            v = x_ref[:, pl.ds(ki, tho), :]
        else:
            v = x_ref[:, pl.ds(ki, tho, stride=s), :]
        return v.astype(jnp.float32)

    rowsum = hslab(0)
    for ki in range(1, k):
        rowsum = rowsum + hslab(ki)            # (bt, tho, w*c)

    # ---- W-direction window sums, still in the fused (w, c) lane layout ----
    # S[l] = sum_{kj < k} rowsum[l + kj*c]
    fast = (c_out == s * c)                    # canonical Linker: stride s, channels x s
    width = wd if fast else (wo - 1) * s * c + c
    need = width + (k - 1) * c
    rs = rowsum
    if need > w_c:                             # zero right-pad; never read by valid lanes
        rs = jnp.concatenate(
            [rowsum, jnp.zeros((bt, tho, need - w_c), jnp.float32)], axis=-1)
    S = rs[:, :, 0:width]
    for kj in range(1, k):
        S = S + rs[:, :, kj * c:kj * c + width]

    if fast:
        # Fused padded output == +pad_lo lane shift of S plus a channel mask.
        # No sub-128-lane concatenate, no 4-D reshape, no masked partial store.
        if pad_lo > 0:
            S = jnp.concatenate(
                [jnp.zeros((bt, tho, pad_lo), jnp.float32), S], axis=-1)[:, :, 0:wd]
            ch = jax.lax.broadcasted_iota(jnp.int32, (bt, tho, wd), 2) % c_out
            keep = (ch >= pad_lo) & (ch < pad_lo + c)
            out = jnp.where(keep, S * inv, 0.0)
        else:
            out = S * inv
        o_ref[...] = out.astype(out_dtype)
    else:
        # General fallback (uncommon shapes): assemble the fused padded row by
        # concatenating per-column window sums with the zero pads.
        pieces = []
        zlo = jnp.zeros((bt, tho, pad_lo), out_dtype) if pad_lo > 0 else None
        zmid = jnp.zeros((bt, tho, 2 * pad_lo), out_dtype) if pad_lo > 0 else None
        for j in range(wo):
            col = (S[:, :, j * s * c:j * s * c + c] * inv).astype(out_dtype)
            if pad_lo > 0:
                if j == 0:
                    pieces.append(zlo)
                pieces.append(col)
                pieces.append(zlo if j == wo - 1 else zmid)
            else:
                pieces.append(col)
        out = pieces[0] if len(pieces) == 1 else jnp.concatenate(pieces, axis=-1)
        o_ref[...] = out


def _vmem_budget_bytes():
    """(per-step tile budget, vmem_limit_bytes) derived from the chip's VMEM."""
    cap = 64 * 1024 * 1024                     # conservative default: v7x per-core VMEM
    try:
        cap = int(getattr(pltpu.get_tpu_info(), "vmem_capacity_bytes", cap))
    except Exception:
        pass
    # ~25% of VMEM per pipelined step, ~75% scoped limit: headroom for Mosaic
    # internal scratch + in-kernel temporaries on every generation
    # (v5e/v6e: 32 MiB budget / 96 MiB limit, v7x: 16 MiB / 48 MiB).
    return cap // 4, (3 * cap) // 4


def _cdiv(a, b):
    return -(-a // b)


def linker_forward_nhwc(x_nhwc, inplanes, outplanes, kernel_size, strides):
    """Transpose-free NHWC entry point (preferred for NHWC pipelines)."""
    n, h, w, c = x_nhwc.shape
    assert c == inplanes
    assert outplanes >= inplanes, "Linker zero-pads channels (outplanes >= inplanes)"
    k, s = int(kernel_size), int(strides)
    # AvgPool2d defaults: padding=0, ceil_mode=False, count_include_pad=True
    ho = (h - k) // s + 1
    wo = (w - k) // s + 1
    pad_lo = (outplanes - inplanes) // 2
    c_out = c + 2 * pad_lo                     # exact F.pad semantics (odd diff -> != outplanes)

    itemsize = jnp.dtype(x_nhwc.dtype).itemsize
    budget, vmem_limit = _vmem_budget_bytes()
    MIN_STEPS = 4                              # >=2 keeps both v7x TCs busy, >=4 overlaps DMA

    def step_bytes(bt, tho, h_blk):
        io = 2 * bt * (h_blk * w * c + tho * wo * c_out) * itemsize   # double-buffered blocks
        tmp = 8 * bt * tho * (w * c + wo * c_out)                     # f32 in-kernel temporaries
        return io + tmp

    # ---- batch tile: biggest that fits the budget, but keep >= MIN_STEPS ----
    tho, h_blk, nh = ho, h, 1
    bt = max(1, min(n, budget // max(step_bytes(1, tho, h_blk), 1)))
    bt = min(bt, max(1, _cdiv(n, MIN_STEPS)))
    nb = _cdiv(n, bt)                          # uneven tail handled by Pallas block padding

    # ---- optional ho tile (layout-legal: tho | ho, tho % 8 == 0, s == k) ----
    if s == k and ho % 8 == 0:
        for cand in range(ho, 7, -8):
            if ho % cand:
                continue
            if step_bytes(bt, cand, cand * k) <= budget and nb * (ho // cand) >= MIN_STEPS:
                tho, h_blk, nh = cand, cand * k, ho // cand
                break

    kernel = functools.partial(_linker_kernel, k=k, s=s, tho=tho, wo=wo, c=c,
                               pad_lo=pad_lo)

    cost = pl.CostEstimate(
        flops=int(n * ho * wo * c * (k * k + 1)),
        transcendentals=0,
        bytes_accessed=int((n * h * w * c + n * ho * wo * c_out) * itemsize),
    )

    out_fused = pl.pallas_call(
        kernel,
        out_shape=jax.ShapeDtypeStruct((n, ho, wo * c_out), x_nhwc.dtype),
        grid_spec=pltpu.PrefetchScalarGridSpec(
            num_scalar_prefetch=0,
            grid=(nb, nh),
            in_specs=[pl.BlockSpec((bt, h_blk, w * c), lambda b, i: (b, i, 0))],
            out_specs=pl.BlockSpec((bt, tho, wo * c_out), lambda b, i: (b, i, 0)),
        ),
        compiler_params=pltpu.CompilerParams(
            dimension_semantics=("parallel", "parallel"),
            vmem_limit_bytes=vmem_limit,
        ),
        cost_estimate=cost,
    )(x_nhwc.reshape(n, h, w * c))

    return out_fused.reshape(n, ho, wo, c_out)


def linker_forward(x_nchw, inplanes, outplanes, kernel_size, strides):
    """NCHW drop-in equivalent of Linker(inplanes, outplanes, k, s)(x)."""
    # NOTE: the two transposes exist only for PyTorch NCHW layout parity; an
    # NHWC pipeline should call linker_forward_nhwc directly (reshape-only).
    x_nhwc = jnp.transpose(x_nchw, (0, 2, 3, 1))
    out_nhwc = linker_forward_nhwc(x_nhwc, inplanes, outplanes, kernel_size, strides)
    return jnp.transpose(out_nhwc, (0, 3, 1, 2))


def _reference(x_nchw, inplanes, outplanes, kernel_size, strides):
    """Pure-JAX reference of the PyTorch forward (NCHW)."""
    n, c, h, w = x_nchw.shape
    k, s = int(kernel_size), int(strides)
    ho = (h - k) // s + 1
    wo = (w - k) // s + 1
    rows = []
    for i in range(ho):
        cols = []
        for j in range(wo):
            win = x_nchw[:, :, i * s:i * s + k, j * s:j * s + k]
            cols.append(jnp.mean(win, axis=(2, 3)))
        rows.append(jnp.stack(cols, axis=-1))            # (n, c, wo)
    pooled = jnp.stack(rows, axis=-2)                    # (n, c, ho, wo)
    pad = (outplanes - inplanes) // 2
    return jnp.pad(pooled, ((0, 0), (pad, pad), (0, 0), (0, 0)))


if __name__ == "__main__":
    # Small deterministic example consistent with the module:
    # Linker(inplanes=4, outplanes=8, kernel_size=2, strides=2)
    inplanes, outplanes, kernel_size, strides = 4, 8, 2, 2

    key = jax.random.PRNGKey(0)
    x = jax.random.normal(key, (2, inplanes, 16, 16), dtype=jnp.float32)  # NCHW

    out = linker_forward(x, inplanes, outplanes, kernel_size, strides)
    out = jax.block_until_ready(out)

    expected = _reference(x, inplanes, outplanes, kernel_size, strides)
    assert out.shape == expected.shape, (out.shape, expected.shape)
    assert jnp.allclose(out, expected, atol=1e-5, rtol=1e-5), "mismatch vs reference"

    print("KERNEL_OK")
</pallas_src>

<mosaic_0001>
module attributes {stable_mosaic.version = 11 : i64} {
  func.func @_linker_kernel(%arg0: i32, %arg1: i32, %arg2: memref<1x16x64xf32, #tpu.memory_space<vmem>>, %arg3: memref<1x8x64xf32, #tpu.memory_space<vmem>>) attributes {dimension_semantics = [#tpu.dimension_semantics<parallel>, #tpu.dimension_semantics<parallel>], iteration_bounds = array<i64: 2, 1>, scalar_prefetch = 0 : i64, scratch_operands = 0 : i64, tpu.core_type = #tpu.core_type<tc>, window_params = [{transform_indices = @transform_0, window_bounds = array<i64: 1, 16, 64>}, {transform_indices = @transform_1, window_bounds = array<i64: 1, 8, 64>}]} {
    %c0 = arith.constant 0 : index
    %c0_0 = arith.constant 0 : index
    %c0_1 = arith.constant 0 : index
    %0 = tpu.strided_load %arg2[%c0, %c0_0, %c0_1] {strides = array<i32: 1, 2, 1>} : memref<1x16x64xf32, #tpu.memory_space<vmem>>, vector<1x8x64xf32>
    %c0_2 = arith.constant 0 : index
    %c1 = arith.constant 1 : index
    %c0_3 = arith.constant 0 : index
    %1 = tpu.strided_load %arg2[%c0_2, %c1, %c0_3] {strides = array<i32: 1, 2, 1>} : memref<1x16x64xf32, #tpu.memory_space<vmem>>, vector<1x8x64xf32>
    %2 = arith.addf %0, %1 : vector<1x8x64xf32>
    %cst = arith.constant 0.000000e+00 : f32
    %3 = vector.broadcast %cst : f32 to vector<1x8x4xf32>
    %4 = tpu.concatenate %2, %3 in 2 : vector<1x8x64xf32>, vector<1x8x4xf32> -> vector<1x8x68xf32>
    %5 = vector.extract_strided_slice %4 {offsets = [0, 0, 0], sizes = [1, 8, 64], strides = [1, 1, 1]} : vector<1x8x68xf32> to vector<1x8x64xf32>
    %6 = vector.extract_strided_slice %4 {offsets = [0, 0, 4], sizes = [1, 8, 64], strides = [1, 1, 1]} : vector<1x8x68xf32> to vector<1x8x64xf32>
    %7 = arith.addf %5, %6 : vector<1x8x64xf32>
    %cst_4 = arith.constant 0.000000e+00 : f32
    %8 = vector.broadcast %cst_4 : f32 to vector<1x8x2xf32>
    %9 = tpu.concatenate %8, %7 in 2 : vector<1x8x2xf32>, vector<1x8x64xf32> -> vector<1x8x66xf32>
    %10 = vector.extract_strided_slice %9 {offsets = [0, 0, 0], sizes = [1, 8, 64], strides = [1, 1, 1]} : vector<1x8x66xf32> to vector<1x8x64xf32>
    %11 = tpu.iota {dimensions = array<i32: 2>} : vector<1x8x64xi32>
    %c8_i32 = arith.constant 8 : i32
    %c0_i32 = arith.constant 0 : i32
    %12 = arith.cmpi eq, %c8_i32, %c0_i32 : i32
    %c1_i32 = arith.constant 1 : i32
    %13 = arith.select %12, %c1_i32, %c8_i32 : i32
    %14 = vector.broadcast %13 : i32 to vector<1x8x64xi32>
    %15 = arith.remsi %11, %14 : vector<1x8x64xi32>
    %c0_i32_5 = arith.constant 0 : i32
    %16 = vector.broadcast %c0_i32_5 : i32 to vector<1x8x64xi32>
    %17 = arith.cmpi ne, %15, %16 : vector<1x8x64xi32>
    %c0_i32_6 = arith.constant 0 : i32
    %18 = vector.broadcast %c0_i32_6 : i32 to vector<1x8x64xi32>
    %19 = arith.cmpi slt, %15, %18 : vector<1x8x64xi32>
    %c0_i32_7 = arith.constant 0 : i32
    %20 = arith.cmpi slt, %13, %c0_i32_7 : i32
    %21 = vector.broadcast %20 : i1 to vector<1x8x64xi1>
    %22 = vector.broadcast %21 : vector<1x8x64xi1> to vector<1x8x64xi1>
    %23 = arith.xori %19, %22 : vector<1x8x64xi1>
    %24 = arith.andi %23, %17 : vector<1x8x64xi1>
    %25 = vector.broadcast %13 : i32 to vector<1x8x64xi32>
    %26 = arith.addi %15, %25 : vector<1x8x64xi32>
    %27 = arith.select %24, %26, %15 : vector<1x8x64xi1>, vector<1x8x64xi32>
    %c2_i32 = arith.constant 2 : i32
    %28 = vector.broadcast %c2_i32 : i32 to vector<1x8x64xi32>
    %29 = arith.cmpi sge, %27, %28 : vector<1x8x64xi32>
    %c6_i32 = arith.constant 6 : i32
    %30 = vector.broadcast %c6_i32 : i32 to vector<1x8x64xi32>
    %31 = arith.cmpi slt, %27, %30 : vector<1x8x64xi32>
    %32 = arith.andi %29, %31 : vector<1x8x64xi1>
    %cst_8 = arith.constant 2.500000e-01 : f32
    %33 = vector.broadcast %cst_8 : f32 to vector<1x8x64xf32>
    %34 = arith.mulf %10, %33 : vector<1x8x64xf32>
    %cst_9 = arith.constant 0.000000e+00 : f32
    %35 = vector.broadcast %cst_9 : f32 to vector<1x8x64xf32>
    %36 = arith.select %32, %34, %35 : vector<1x8x64xi1>, vector<1x8x64xf32>
    %c0_10 = arith.constant 0 : index
    %c0_11 = arith.constant 0 : index
    %c0_12 = arith.constant 0 : index
    %37 = vector.load %arg3[%c0_10, %c0_11, %c0_12] : memref<1x8x64xf32, #tpu.memory_space<vmem>>, vector<1x8x64xf32>
    tpu.vector_store %arg3[%c0_10, %c0_11, %c0_12], %36 {strides = array<i32>} : memref<1x8x64xf32, #tpu.memory_space<vmem>>, vector<1x8x64xf32>,
    return
  }
  func.func @transform_0(%arg0: i32, %arg1: i32) -> (i32, i32, i32) {
    %c0_i32 = arith.constant 0 : i32
    %c0_i32_0 = arith.constant 0 : i32
    return %arg0, %arg1, %c0_i32 : i32, i32, i32
  }
  func.func @transform_1(%arg0: i32, %arg1: i32) -> (i32, i32, i32) {
    %c0_i32 = arith.constant 0 : i32
    %c0_i32_0 = arith.constant 0 : i32
    return %arg0, %arg1, %c0_i32 : i32, i32, i32
  }
}

</mosaic_0001>

<llo_original>
// kernel: tpu_custom_call.1
$region0: #{tpu_custom_call.1}
  #allocation0 [shape = 'u32[]', space=smem, size = 0x4, offset = 0x4, fixed_abs, tag = 'smem constant byte address 0x4 - core index']
  #allocation1 [shape = 'u32[144,128]{1,0:T(1,128)}', space=vmem, size = 0x12000, scoped, tag = 'internal scratch']
  %s0 = inlined_call_operand.hbm [shape: f32[2,16,64], index: 0, kind: input, shape index: {}]
  %s1 = inlined_call_operand.hbm [shape: f32[2,8,64], index: 1, kind: output, shape index: {}]
  %s2 = sld [smem:[#allocation0]]
  $region41: #{tpu_custom_call.1} parent=0
    _
  %s4 = ssub.s32 1, %s2
  %s5 = scalar_select 0, %s4, %s2
  $region1: #{tpu_custom_call.1} parent=0
    #allocation2 [shape = 'u8[16384]{0}', space=vmem, size = 0x4000, scoped, tag = 'input window, operand 0']
    #allocation3 [shape = 's32[2]{0}', space=sflag, size = 0x8, scoped, tag = 'scoped memory for tpu_custom_call.1']
    #allocation4 [shape = 's32[2]{0}', space=sflag, size = 0x8, scoped, tag = 'scoped memory for tpu_custom_call.1']
    #allocation5 [shape = 'u8[8192]{0}', space=vmem, size = 0x2000, scoped, tag = 'output window, operand 0']
    %6 = vsyncpa [#allocation3], 0
    %s7 = scalar_lea.sflag [#allocation3], 1
    %8 = vsyncpa %s7, 0
    %9 = vsyncpa [#allocation4], 0
    %s10 = scalar_lea.sflag [#allocation4], 1
    %11 = vsyncpa %s10, 0
    loop: start=0, step=1, limit=4
    $region2: #{tpu_custom_call.1} parent=1 // loop_pre_header
      _
    $region3: #{tpu_custom_call.1} parent=1 // loop_header
      %s13 = sphi 0, %s17
      %p14 = scmp.ge.s32.totalorder %s13, 4
      %s20 = sphi 0, %s32
      %s21 = sphi 0, %s28
      %s22 = sphi 0, %s20
      %s23 = sphi 0, %s21
      %s24 = sphi 0, %s22
      %s25 = sphi 0, %s23
      %s37 = sphi 0, %s39
      %s40 = sphi 0, %s37
      %s41 = sphi 0, %s40
      %s57 = sphi 0, %s41
      %s65 = sphi 0, %s67
      %s68 = sphi 0, %s65
      %s69 = sphi 0, %s68
      %s85 = sphi 0, %s69
    $region4: #{tpu_custom_call.1} parent=1 // loop_header_branch
      %16 = sbr.rel (%p14) target = $region8
    $region5: #{tpu_custom_call.1} parent=1 // loop_body
      %s18 = ssub.s32 %s13, 1
      %s19 = ssub.s32 %s13, 2
      %s26 = sadd.s32 1, %s21
      %p27 = scmp.ge.s32.totalorder %s26, 1
      %s28 = scalar_select %p27, 0, %s26
      %s29 = sadd.s32 1, %s20
      %s30 = scalar_select %p27, %s29, %s20
      %p31 = scmp.ge.s32.totalorder %s30, 2
      %s32 = scalar_select %p31, 0, %s30
      %s33 = ssub.s32 %s20, %s32
      %s34 = ssub.s32 %s21, %s28
      %s35 = sor.u32 %s33, %s34
      %p36 = scmp.eq.s32.totalorder %s35, 0
      %s38 = sadd.s32 %s37, 1
      %s39 = scalar_select %p36, %s37, %s38
      %p42 = pneg %p36
      %p43 = scmp.eq.s32.totalorder %s13, 1
      %p44 = por %p42, %p43
      %p45 = scmp.ne.s32.totalorder %s37, %s40
      %p46 = scmp.eq.s32.totalorder %s13, 0
      %p47 = por %p45, %p46
      %p48 = scmp.ne.s32.totalorder %s37, %s40
      %p49 = scmp.eq.s32.totalorder %s18, 1
      %p50 = por %p48, %p49
      %p51 = scmp.ne.s32.totalorder %s40, %s41
      %p52 = scmp.eq.s32.totalorder %s18, 0
      %p53 = por %p51, %p52
      %p54 = scmp.ne.s32.totalorder %s40, %s41
      %p55 = scmp.eq.s32.totalorder %s19, 1
      %p56 = por %p54, %p55
      %p58 = scmp.ne.s32.totalorder %s41, %s57
      %p59 = scmp.eq.s32.totalorder %s19, 0
      %p60 = por %p58, %p59
      %s61 = ssub.s32 %s20, %s32
      %s62 = ssub.s32 %s21, %s28
      %s63 = sor.u32 %s61, %s62
      %p64 = scmp.eq.s32.totalorder %s63, 0
      %s66 = sadd.s32 %s65, 1
      %s67 = scalar_select %p64, %s65, %s66
      %p70 = pneg %p64
      %p71 = scmp.eq.s32.totalorder %s13, 1
      %p72 = por %p70, %p71
      %p73 = scmp.ne.s32.totalorder %s65, %s68
      %p74 = scmp.eq.s32.totalorder %s13, 0
      %p75 = por %p73, %p74
      %p76 = scmp.ne.s32.totalorder %s65, %s68
      %p77 = scmp.eq.s32.totalorder %s18, 1
      %p78 = por %p76, %p77
      %p79 = scmp.ne.s32.totalorder %s68, %s69
      %p80 = scmp.eq.s32.totalorder %s18, 0
      %p81 = por %p79, %p80
      %p82 = scmp.ne.s32.totalorder %s68, %s69
      %p83 = scmp.eq.s32.totalorder %s19, 1
      %p84 = por %p82, %p83
      %p86 = scmp.ne.s32.totalorder %s69, %s85
      %p87 = scmp.eq.s32.totalorder %s19, 0
      %p88 = por %p86, %p87
      %p89 = scmp.le.s32.totalorder 1, %s13
      %p90 = scmp.lt.s32.totalorder %s13, 3
      %p91 = pnand %p89, %p90
      %p92 = pneg %p91
      // Predicated region
      $region9: #{tpu_custom_call.1} parent=5 // pred_check
        _
      $region10: #{tpu_custom_call.1} parent=5 // pred_check_branch
        %94 = sbr.rel (%p91) target = $region12
      $region11: #{tpu_custom_call.1} parent=5 // pred_region
        %s95 = ssub.s32 %s13, 1
      $region12: #{tpu_custom_call.1} parent=5 // pred_fallthru
        _
      %p96 = scmp.lt.s32.totalorder %s13, 2
      // Predicated region
      $region13: #{tpu_custom_call.1} parent=5 // pred_check
        %p97 = pneg %p96
      $region14: #{tpu_custom_call.1} parent=5 // pred_check_branch
        %99 = sbr.rel (%p97) target = $region16
      $region15: #{tpu_custom_call.1} parent=5 // pred_region
        // Predicated region
        $region17: #{tpu_custom_call.1} parent=15 // pred_check
          %p100 = pneg %p47
        $region18: #{tpu_custom_call.1} parent=15 // pred_check_branch
          %102 = sbr.rel (%p100) target = $region20
        $region19: #{tpu_custom_call.1} parent=15 // pred_region
          %s103 = sand.u32 %s37, 1
          %s104 = scalar_lea.sflag [#allocation3], %s103
          %s105 = sand.u32 %s37, 1
          %s106 = smul.addr %s105, 16
          %s107 = scalar_lea.vmem [#allocation2], %s106
          %s108 = smul.u32 2, %s21
          %s110 = ssub.s32 256, 256
          %111 = vsyncadd %s104, %s110
          %s112 = smul.addr %s20, 2
          %s113 = sadd.s32 %s108, %s112
          %s114 = smul.addr %s113, 128
          %s115 = scalar_lea.hbm %s0, %s114
          %s116 = sshll.u32 %s107, 4
          %s117 = int_to_ptr.vmem [resolvable:$true] %s116
          %122 = dma.hbm_to_vmem [thread:$0]  %s115, 256, %s117, %s104, 128, 128, 8
        $region20: #{tpu_custom_call.1} parent=15 // pred_fallthru
          _
      $region16: #{tpu_custom_call.1} parent=5 // pred_fallthru
        _
      %p123 = scmp.le.s32.totalorder 1, %s13
      %p124 = scmp.lt.s32.totalorder %s13, 3
      %p125 = pnand %p123, %p124
      %p126 = pneg %p125
      // Predicated region
      $region21: #{tpu_custom_call.1} parent=5 // pred_check
        _
      $region22: #{tpu_custom_call.1} parent=5 // pred_check_branch
        %128 = sbr.rel (%p125) target = $region24
      $region23: #{tpu_custom_call.1} parent=5 // pred_region
        %s129 = ssub.s32 %s13, 1
        %s130 = sand.u32 %s40, 1
        %s131 = scalar_lea.sflag [#allocation3], %s130
        %s132 = sand.u32 %s40, 1
        %s133 = smul.addr %s132, 16
        %s134 = scalar_lea.vmem [#allocation2], %s133
        // Predicated region
        $region25: #{tpu_custom_call.1} parent=23 // pred_check
          %p135 = pneg %p53
        $region26: #{tpu_custom_call.1} parent=23 // pred_check_branch
          %137 = sbr.rel (%p135) target = $region28
        $region27: #{tpu_custom_call.1} parent=23 // pred_region
          %138 = dma.done %s131, 256
        $region28: #{tpu_custom_call.1} parent=23 // pred_fallthru
          _
        %s139 = sand.u32 %s40, 1
        %s140 = scalar_lea.sflag [#allocation3], %s139
        %s141 = sand.u32 %s40, 1
        %s142 = smul.addr %s141, 16
        %s143 = scalar_lea.vmem [#allocation2], %s142
        %p144 = pneg %p53
        %p145 = pneg %p50
        %p146 = pneg %p81
        %p147 = pneg %p78
        %s148 = sand.u32 %s68, 1
        %s149 = scalar_lea.sflag [#allocation4], %s148
        %s150 = sand.u32 %s68, 1
        %s151 = smul.addr %s150, 8
        %s152 = scalar_lea.vmem [#allocation5], %s151
        %s153 = smul.u32 2, %s23
        %v154 = vld [vmem:[%s134] ss:$2 sm:$0xff]
        %s155 = scalar_lea.vmem %s134, 1 [#allocation2]
        %v156 = vld [vmem:[%s155] ss:$2 sm:$0xff]
        %v157 = vadd.f32 %v154, %v156
        %vm158 = vcmask 523264
        %v159 = vsel %vm158, %v157, 0.0
        %161 = vrot.lane.b32.xlu0 %v159, 124
        %v162 = vpop.permute.xlu0 %161
        %v164 = vadd.f32 %v159, %v162
        %166 = vrot.lane.b32.xlu0 %v164, 2
        %v167 = vpop.permute.xlu0 %166
        %vm169 = vcmask 15360
        %v170 = vsel %vm169, 0.0, %v167
        %v171 = vlaneseq
        %v172 = vand.u32 %v171, 127
        %vm173 = vcmp.lt.s32.totalorder %v172, 0
        %v174 = vsub.s32 0, %v172
        %v175 = vsel %vm173, %v174, %v172
        %v176 = vshrl.u32 %v175, 3
        %v177 = vand.u32 %v175, 7
        %v178 = vsub.s32 0, %v177
        %v179 = vsel %vm173, %v178, %v177
        %vm180 = vcmp.ne.s32.totalorder %v179, 0
        %vm181 = vcmp.lt.s32.totalorder %v179, 0
        %vm182 = vmand %vm181, %vm180
        %v183 = vadd.s32 %v179, 8
        %v184 = vsel %vm182, %v183, %v179
        %vm185 = vcmp.ge.s32.totalorder %v184, 2
        %vm186 = vcmp.lt.s32.totalorder %v184, 6
        %vm187 = vmand %vm185, %vm186
        %v188 = vmul.f32 %v170, 0.25
        %v189 = vsel %vm187, %v188, 0.0
        %190 = vst.msk [vmem:[%s152] sm:$0xff] %vm158, %v189
        %s191 = sand.u32 %s68, 1
        %s192 = scalar_lea.sflag [#allocation4], %s191
        %s193 = sand.u32 %s68, 1
        %s194 = smul.addr %s193, 8
        %s195 = scalar_lea.vmem [#allocation5], %s194
        // Predicated region
        $region29: #{tpu_custom_call.1} parent=23 // pred_check
          %p196 = pneg %p78
        $region30: #{tpu_custom_call.1} parent=23 // pred_check_branch
          %198 = sbr.rel (%p196) target = $region32
        $region31: #{tpu_custom_call.1} parent=23 // pred_region
          %s200 = ssub.s32 128, 128
          %201 = vsyncadd %s192, %s200
          %s202 = sadd.s32 %s23, %s22
          %s203 = smul.addr %s202, 128
          %s204 = scalar_lea.hbm %s1, %s203
          %s206 = sshll.u32 %s195, 4
          %s207 = int_to_ptr.vmem [resolvable:$true] %s206
          %209 = dma.vmem_to_hbm [thread:$0]  %s207, 128, %s204, %s192
        $region32: #{tpu_custom_call.1} parent=23 // pred_fallthru
          _
      $region24: #{tpu_custom_call.1} parent=5 // pred_fallthru
        _
      %p210 = scmp.le.s32.totalorder 2, %s13
      // Predicated region
      $region33: #{tpu_custom_call.1} parent=5 // pred_check
        %p211 = pneg %p210
      $region34: #{tpu_custom_call.1} parent=5 // pred_check_branch
        %213 = sbr.rel (%p211) target = $region36
      $region35: #{tpu_custom_call.1} parent=5 // pred_region
        %s214 = ssub.s32 %s13, 2
        // Predicated region
        $region37: #{tpu_custom_call.1} parent=35 // pred_check
          %p215 = pneg %p84
        $region38: #{tpu_custom_call.1} parent=35 // pred_check_branch
          %217 = sbr.rel (%p215) target = $region40
        $region39: #{tpu_custom_call.1} parent=35 // pred_region
          %s218 = sand.u32 %s69, 1
          %s219 = scalar_lea.sflag [#allocation4], %s218
          %s220 = sand.u32 %s69, 1
          %s221 = smul.addr %s220, 8
          %s222 = scalar_lea.vmem [#allocation5], %s221
          %223 = dma.done %s219, 128
        $region40: #{tpu_custom_call.1} parent=35 // pred_fallthru
          _
      $region36: #{tpu_custom_call.1} parent=5 // pred_fallthru
        _
    $region6: #{tpu_custom_call.1} parent=1 // loop_footer
      %s17 = sadd.s32 1, %s13
    $region7: #{tpu_custom_call.1} parent=1 // loop_footer_branch
      %12 = sbr.rel target = $region3
    $region8: #{tpu_custom_call.1} parent=1 // loop_exit
      _
    %224 = vsyncpa [#allocation3], 1
    %s225 = scalar_lea.sflag [#allocation3], 1
    %226 = vsyncpa %s225, 1
    %227 = vsyncpa [#allocation4], 1
    %s228 = scalar_lea.sflag [#allocation4], 1
    %229 = vsyncpa %s228, 1

</llo_original>
